<compile_context>
chip_gen: v5e
topology: v5e:2x2
jax: 0.10.0
libtpu: 0.0.40
codegen_flags: <defaults>
</compile_context>

<pallas_src>
import functools
import math

import jax
import jax.numpy as jnp
from jax.experimental import pallas as pl
from jax.experimental.pallas import tpu as pltpu


def _conv1x1_kernel(x_ref, w_ref, b_ref, o_ref, *, use_mxu):
    # x_ref: (C, tm)   w_ref: (C, K)   b_ref: (K, 1)   o_ref: (K, tm)
    x = x_ref[...].astype(jnp.float32)
    w = w_ref[...].astype(jnp.float32)
    b = b_ref[...]
    if use_mxu:
        # K large enough to fill MXU output columns: contract over C on MXU.
        acc = jax.lax.dot_general(
            w, x, dimension_numbers=(((0,), (0,)), ((), ())),
            preferred_element_type=jnp.float32)              # (K, tm)
        o_ref[...] = (acc + b).astype(o_ref.dtype)
    else:
        # Small K (typical num_classes == 1): VPU broadcast-multiply plus a
        # C-term reduction over sublanes; keeps the kernel bandwidth-bound.
        K = w.shape[1]
        for k in range(K):
            wk = w[:, k:k + 1]                               # (C, 1)
            row = jnp.sum(wk * x, axis=0, keepdims=True)     # (1, tm)
            o_ref[k:k + 1, :] = (row + b[k:k + 1, :]).astype(o_ref.dtype)


def conv1x1(x_ncm, w, b, *, target_tm=2048):
    """Per-pixel linear map: (N, C, M) x (C, K) + (K,) -> (N, K, M)."""
    N, C, M = x_ncm.shape
    K = w.shape[1]
    lanes = 128
    # Large lane tiles amortize the ~600-cycle per-grid-step overhead; even at
    # tm=2048 the double-buffered tiles are <100 KiB, well under the scoped
    # VMEM limit on v5e/v6e/v7x, so no vmem_limit_bytes override is needed.
    tm = min(target_tm, pl.cdiv(M, lanes) * lanes)
    M_pad = pl.cdiv(M, tm) * tm
    if M_pad != M:
        x_ncm = jnp.pad(x_ncm, ((0, 0), (0, 0), (0, M_pad - M)))
    w_f32 = w.astype(jnp.float32)
    b_col = b.astype(jnp.float32).reshape(K, 1)

    itemsize = x_ncm.dtype.itemsize
    cost = pl.CostEstimate(
        flops=2 * N * M_pad * C * K,
        transcendentals=0,
        bytes_accessed=(N * C * M_pad * itemsize
                        + N * K * M_pad * itemsize
                        + C * K * 4 + K * 4),
    )

    kernel = functools.partial(_conv1x1_kernel, use_mxu=(K >= 128))

    out = pl.pallas_call(
        kernel,
        out_shape=jax.ShapeDtypeStruct((N, K, M_pad), x_ncm.dtype),
        grid_spec=pltpu.PrefetchScalarGridSpec(
            num_scalar_prefetch=0,
            grid=(N, M_pad // tm),
            in_specs=[
                # x: batch dim squeezed, C on sublanes, M (lane-dense) tiles.
                pl.BlockSpec((None, C, tm), lambda n, i: (n, 0, i)),
                # weight / bias: tiny, constant across the grid.
                pl.BlockSpec((C, K), lambda n, i: (0, 0)),
                pl.BlockSpec((K, 1), lambda n, i: (0, 0)),
            ],
            out_specs=pl.BlockSpec((None, K, tm), lambda n, i: (n, 0, i)),
        ),
        compiler_params=pltpu.CompilerParams(
            dimension_semantics=("parallel", "parallel")),
        cost_estimate=cost,
    )(x_ncm, w_f32, b_col)

    if M_pad != M:
        out = out[:, :, :M]
    return out


class LinearClassifierPallas:
    """JAX/Pallas port of topaz LinearClassifier with identity `features`."""

    def __init__(self, latent_dim, num_classes=1, dims=2, key=None):
        if key is None:
            key = jax.random.PRNGKey(0)
        kw, kb = jax.random.split(key)
        # Deterministic init mimicking nn.ConvNd default (+/- 1/sqrt(fan_in)).
        bound = 1.0 / (latent_dim ** 0.5)
        # weight layout (C_in, num_classes) == Conv weight (K, C, 1, ...) transposed.
        self.w = jax.random.uniform(kw, (latent_dim, num_classes),
                                    jnp.float32, -bound, bound)
        self.b = jax.random.uniform(kb, (num_classes,),
                                    jnp.float32, -bound, bound)
        self.latent_dim = latent_dim
        self.num_classes = num_classes
        self.dims = dims

    def __call__(self, x):
        # features(x) modeled as identity (see TODO above).
        z = x                                        # (N, C, *spatial)
        N, C = z.shape[0], z.shape[1]
        spatial = z.shape[2:]
        assert C == self.latent_dim
        M = math.prod(spatial)
        z_flat = z.reshape(N, C, M)                  # contiguous; no transpose
        y_flat = conv1x1(z_flat, self.w, self.b)     # (N, K, M)
        return y_flat.reshape((N, self.num_classes) + spatial)


def _reference(x_nchw, w, b):
    # 1x1 conv reference in plain JAX (2-D case) for sanity check.
    y = jnp.einsum('nchw,ck->nkhw', x_nchw, w) + b.reshape(1, -1, 1, 1)
    return y


if __name__ == "__main__":
    key = jax.random.PRNGKey(0)
    kx, kp, kx2, kp2 = jax.random.split(key, 4)

    # Primary check: batch=2, latent_dim=4, spatial 16x16, num_classes=1.
    N, C, H, W = 2, 4, 16, 16
    x = jax.random.normal(kx, (N, C, H, W), jnp.float32)
    model = LinearClassifierPallas(latent_dim=C, num_classes=1, key=kp)
    y = jax.block_until_ready(model(x))
    y_ref = _reference(x, model.w, model.b)
    assert y.shape == (N, 1, H, W)
    assert jnp.allclose(y, y_ref, atol=1e-5, rtol=1e-5)

    # Secondary check: spatial size not a multiple of 128 (exercises the
    # padding path) and num_classes > 1.
    N2, C2, H2, W2, K2 = 1, 4, 12, 12, 2
    x2 = jax.random.normal(kx2, (N2, C2, H2, W2), jnp.float32)
    model2 = LinearClassifierPallas(latent_dim=C2, num_classes=K2, key=kp2)
    y2 = jax.block_until_ready(model2(x2))
    y2_ref = _reference(x2, model2.w, model2.b)
    assert y2.shape == (N2, K2, H2, W2)
    assert jnp.allclose(y2, y2_ref, atol=1e-5, rtol=1e-5)

    print("KERNEL_OK")
</pallas_src>

<mosaic_0001>
module attributes {stable_mosaic.version = 11 : i64} {
  func.func @_conv1x1_kernel(%arg0: i32, %arg1: i32, %arg2: memref<1x4x256xf32, #tpu.memory_space<vmem>>, %arg3: memref<4x1xf32, #tpu.memory_space<vmem>>, %arg4: memref<1x1xf32, #tpu.memory_space<vmem>>, %arg5: memref<1x1x256xf32, #tpu.memory_space<vmem>>) attributes {dimension_semantics = [#tpu.dimension_semantics<parallel>, #tpu.dimension_semantics<parallel>], iteration_bounds = array<i64: 2, 1>, scalar_prefetch = 0 : i64, scratch_operands = 0 : i64, tpu.core_type = #tpu.core_type<tc>, window_params = [{transform_indices = @transform_0, window_bounds = array<i64: 1, 4, 256>}, {pipeline_mode = #tpu.pipeline_mode<synchronous>, transform_indices = @transform_1, window_bounds = array<i64: 4, 1>}, {pipeline_mode = #tpu.pipeline_mode<synchronous>, transform_indices = @transform_2, window_bounds = array<i64: 1, 1>}, {transform_indices = @transform_3, window_bounds = array<i64: 1, 1, 256>}]} {
    %c0 = arith.constant 0 : index
    %c0_0 = arith.constant 0 : index
    %c0_1 = arith.constant 0 : index
    %0 = vector.load %arg2[%c0, %c0_0, %c0_1] : memref<1x4x256xf32, #tpu.memory_space<vmem>>, vector<1x4x256xf32>
    %1 = vector.shape_cast %0 : vector<1x4x256xf32> to vector<4x256xf32>
    %c0_2 = arith.constant 0 : index
    %c0_3 = arith.constant 0 : index
    %2 = vector.load %arg3[%c0_2, %c0_3] : memref<4x1xf32, #tpu.memory_space<vmem>>, vector<4x1xf32>
    %c0_4 = arith.constant 0 : index
    %c0_5 = arith.constant 0 : index
    %3 = vector.load %arg4[%c0_4, %c0_5] : memref<1x1xf32, #tpu.memory_space<vmem>>, vector<1x1xf32>
    %4 = vector.broadcast %2 : vector<4x1xf32> to vector<4x256xf32>
    %5 = arith.mulf %4, %1 : vector<4x256xf32>
    %cst = arith.constant dense<0.000000e+00> : vector<256xf32>
    %6 = vector.multi_reduction <add>, %5, %cst [0] : vector<4x256xf32> to vector<256xf32>
    %7 = vector.shape_cast %6 : vector<256xf32> to vector<1x256xf32>
    %8 = vector.broadcast %3 : vector<1x1xf32> to vector<1x256xf32>
    %9 = arith.addf %7, %8 : vector<1x256xf32>
    %c0_6 = arith.constant 0 : index
    %c0_7 = arith.constant 0 : index
    %c0_8 = arith.constant 0 : index
    %10 = vector.load %arg5[%c0_6, %c0_7, %c0_8] : memref<1x1x256xf32, #tpu.memory_space<vmem>>, vector<1x1x256xf32>
    %11 = vector.shape_cast %10 : vector<1x1x256xf32> to vector<1x256xf32>
    %12 = vector.shape_cast %9 : vector<1x256xf32> to vector<1x1x256xf32>
    tpu.vector_store %arg5[%c0_6, %c0_7, %c0_8], %12 {strides = array<i32>} : memref<1x1x256xf32, #tpu.memory_space<vmem>>, vector<1x1x256xf32>,
    return
  }
  func.func @transform_0(%arg0: i32, %arg1: i32) -> (i32, i32, i32) {
    %c0_i32 = arith.constant 0 : i32
    %c0_i32_0 = arith.constant 0 : i32
    return %arg0, %c0_i32, %arg1 : i32, i32, i32
  }
  func.func @transform_1(%arg0: i32, %arg1: i32) -> (i32, i32) {
    %c0_i32 = arith.constant 0 : i32
    %c0_i32_0 = arith.constant 0 : i32
    %c0_i32_1 = arith.constant 0 : i32
    return %c0_i32, %c0_i32_0 : i32, i32
  }
  func.func @transform_2(%arg0: i32, %arg1: i32) -> (i32, i32) {
    %c0_i32 = arith.constant 0 : i32
    %c0_i32_0 = arith.constant 0 : i32
    %c0_i32_1 = arith.constant 0 : i32
    return %c0_i32, %c0_i32_0 : i32, i32
  }
  func.func @transform_3(%arg0: i32, %arg1: i32) -> (i32, i32, i32) {
    %c0_i32 = arith.constant 0 : i32
    %c0_i32_0 = arith.constant 0 : i32
    return %arg0, %c0_i32, %arg1 : i32, i32, i32
  }
}

</mosaic_0001>

<llo_original>
// kernel: tpu_custom_call.1
$region0: #{tpu_custom_call.1}
  #allocation0 [shape = 'u32[]', space=smem, size = 0x4, offset = 0x4, fixed_abs, tag = 'smem constant byte address 0x4 - core index']
  #allocation1 [shape = 'u32[72,128]{1,0:T(1,128)}', space=vmem, size = 0x9000, scoped, tag = 'internal scratch']
  #allocation2 [shape = 'f32[1,1]{1,0:T(1,128)S(1)}', space=vmem, size = 0x200, scoped, tag = 'scoped memory for tpu_custom_call.1']
  %s0 = inlined_call_operand.hbm [shape: f32[2,4,256], index: 0, kind: input, shape index: {}]
  %s1 = inlined_call_operand.vmem [shape: f32[4,1], index: 1, kind: input, shape index: {}]
  %s2 = inlined_call_operand.<no memory space> [shape: f32[1,1], index: 2, kind: input, shape index: {}]
  %s3 = inlined_call_operand.hbm [shape: f32[2,1,256], index: 3, kind: output, shape index: {}]
  %s4 = sld [smem:[#allocation0]]
  $region49: #{tpu_custom_call.1} parent=0
    _
  %s6 = ssub.s32 1, %s4
  %s7 = scalar_select 0, %s6, %s4
  %v8 = vstv %s2
  %9 = vst [vmem:[#allocation2] sm:$0x1] %v8
  $region1: #{tpu_custom_call.1} parent=0
    #allocation3 [shape = 'u8[8192]{0}', space=vmem, size = 0x2000, scoped, tag = 'input window, operand 0']
    #allocation4 [shape = 's32[2]{0}', space=sflag, size = 0x8, scoped, tag = 'scoped memory for tpu_custom_call.1']
    #allocation5 [shape = 's32[2]{0}', space=sflag, size = 0x8, scoped, tag = 'scoped memory for tpu_custom_call.1']
    #allocation6 [shape = 'u8[2048]{0}', space=vmem, size = 0x800, scoped, tag = 'output window, operand 0']
    %10 = vsyncpa [#allocation4], 0
    %s11 = scalar_lea.sflag [#allocation4], 1
    %12 = vsyncpa %s11, 0
    %13 = vsyncpa [#allocation5], 0
    %s14 = scalar_lea.sflag [#allocation5], 1
    %15 = vsyncpa %s14, 0
    loop: start=0, step=1, limit=4
    $region2: #{tpu_custom_call.1} parent=1 // loop_pre_header
      _
    $region3: #{tpu_custom_call.1} parent=1 // loop_header
      %s17 = sphi 0, %s21
      %p18 = scmp.ge.s32.totalorder %s17, 4
      %s24 = sphi 0, %s36
      %s25 = sphi 0, %s32
      %s26 = sphi 0, %s24
      %s27 = sphi 0, %s25
      %s28 = sphi 0, %s26
      %s29 = sphi 0, %s27
      %s41 = sphi 0, %s43
      %s44 = sphi 0, %s41
      %s45 = sphi 0, %s44
      %s61 = sphi 0, %s45
      %s65 = sphi 0, %s65
      %s67 = sphi 0, %s65
      %s68 = sphi 0, %s67
      %s82 = sphi 0, %s68
      %s86 = sphi 0, %s86
      %s88 = sphi 0, %s86
      %s89 = sphi 0, %s88
      %s103 = sphi 0, %s89
      %s111 = sphi 0, %s113
      %s114 = sphi 0, %s111
      %s115 = sphi 0, %s114
      %s131 = sphi 0, %s115
    $region4: #{tpu_custom_call.1} parent=1 // loop_header_branch
      %20 = sbr.rel (%p18) target = $region8
    $region5: #{tpu_custom_call.1} parent=1 // loop_body
      %s22 = ssub.s32 %s17, 1
      %s23 = ssub.s32 %s17, 2
      %s30 = sadd.s32 1, %s25
      %p31 = scmp.ge.s32.totalorder %s30, 1
      %s32 = scalar_select %p31, 0, %s30
      %s33 = sadd.s32 1, %s24
      %s34 = scalar_select %p31, %s33, %s24
      %p35 = scmp.ge.s32.totalorder %s34, 2
      %s36 = scalar_select %p35, 0, %s34
      %s37 = ssub.s32 %s24, %s36
      %s38 = ssub.s32 %s25, %s32
      %s39 = sor.u32 %s37, %s38
      %p40 = scmp.eq.s32.totalorder %s39, 0
      %s42 = sadd.s32 %s41, 1
      %s43 = scalar_select %p40, %s41, %s42
      %p46 = pneg %p40
      %p47 = scmp.eq.s32.totalorder %s17, 1
      %p48 = por %p46, %p47
      %p49 = scmp.ne.s32.totalorder %s41, %s44
      %p50 = scmp.eq.s32.totalorder %s17, 0
      %p51 = por %p49, %p50
      %p52 = scmp.ne.s32.totalorder %s41, %s44
      %p53 = scmp.eq.s32.totalorder %s22, 1
      %p54 = por %p52, %p53
      %p55 = scmp.ne.s32.totalorder %s44, %s45
      %p56 = scmp.eq.s32.totalorder %s22, 0
      %p57 = por %p55, %p56
      %p58 = scmp.ne.s32.totalorder %s44, %s45
      %p59 = scmp.eq.s32.totalorder %s23, 1
      %p60 = por %p58, %p59
      %p62 = scmp.ne.s32.totalorder %s45, %s61
      %p63 = scmp.eq.s32.totalorder %s23, 0
      %p64 = por %p62, %p63
      %s66 = sadd.s32 %s65, 1
      %p69 = scmp.eq.s32.totalorder %s17, 1
      %p70 = scmp.ne.s32.totalorder %s65, %s67
      %p71 = scmp.eq.s32.totalorder %s17, 0
      %p72 = por %p70, %p71
      %p73 = scmp.ne.s32.totalorder %s65, %s67
      %p74 = scmp.eq.s32.totalorder %s22, 1
      %p75 = por %p73, %p74
      %p76 = scmp.ne.s32.totalorder %s67, %s68
      %p77 = scmp.eq.s32.totalorder %s22, 0
      %p78 = por %p76, %p77
      %p79 = scmp.ne.s32.totalorder %s67, %s68
      %p80 = scmp.eq.s32.totalorder %s23, 1
      %p81 = por %p79, %p80
      %p83 = scmp.ne.s32.totalorder %s68, %s82
      %p84 = scmp.eq.s32.totalorder %s23, 0
      %p85 = por %p83, %p84
      %s87 = sadd.s32 %s86, 1
      %p90 = scmp.eq.s32.totalorder %s17, 1
      %p91 = scmp.ne.s32.totalorder %s86, %s88
      %p92 = scmp.eq.s32.totalorder %s17, 0
      %p93 = por %p91, %p92
      %p94 = scmp.ne.s32.totalorder %s86, %s88
      %p95 = scmp.eq.s32.totalorder %s22, 1
      %p96 = por %p94, %p95
      %p97 = scmp.ne.s32.totalorder %s88, %s89
      %p98 = scmp.eq.s32.totalorder %s22, 0
      %p99 = por %p97, %p98
      %p100 = scmp.ne.s32.totalorder %s88, %s89
      %p101 = scmp.eq.s32.totalorder %s23, 1
      %p102 = por %p100, %p101
      %p104 = scmp.ne.s32.totalorder %s89, %s103
      %p105 = scmp.eq.s32.totalorder %s23, 0
      %p106 = por %p104, %p105
      %s107 = ssub.s32 %s24, %s36
      %s108 = ssub.s32 %s25, %s32
      %s109 = sor.u32 %s107, %s108
      %p110 = scmp.eq.s32.totalorder %s109, 0
      %s112 = sadd.s32 %s111, 1
      %s113 = scalar_select %p110, %s111, %s112
      %p116 = pneg %p110
      %p117 = scmp.eq.s32.totalorder %s17, 1
      %p118 = por %p116, %p117
      %p119 = scmp.ne.s32.totalorder %s111, %s114
      %p120 = scmp.eq.s32.totalorder %s17, 0
      %p121 = por %p119, %p120
      %p122 = scmp.ne.s32.totalorder %s111, %s114
      %p123 = scmp.eq.s32.totalorder %s22, 1
      %p124 = por %p122, %p123
      %p125 = scmp.ne.s32.totalorder %s114, %s115
      %p126 = scmp.eq.s32.totalorder %s22, 0
      %p127 = por %p125, %p126
      %p128 = scmp.ne.s32.totalorder %s114, %s115
      %p129 = scmp.eq.s32.totalorder %s23, 1
      %p130 = por %p128, %p129
      %p132 = scmp.ne.s32.totalorder %s115, %s131
      %p133 = scmp.eq.s32.totalorder %s23, 0
      %p134 = por %p132, %p133
      %p135 = scmp.le.s32.totalorder 1, %s17
      %p136 = scmp.lt.s32.totalorder %s17, 3
      %p137 = pnand %p135, %p136
      %p138 = pneg %p137
      // Predicated region
      $region9: #{tpu_custom_call.1} parent=5 // pred_check
        _
      $region10: #{tpu_custom_call.1} parent=5 // pred_check_branch
        %140 = sbr.rel (%p137) target = $region12
      $region11: #{tpu_custom_call.1} parent=5 // pred_region
        %s141 = ssub.s32 %s17, 1
        // Predicated region
        $region13: #{tpu_custom_call.1} parent=11 // pred_check
          %p142 = pneg %p78
        $region14: #{tpu_custom_call.1} parent=11 // pred_check_branch
          %144 = sbr.rel (%p142) target = $region16
        $region15: #{tpu_custom_call.1} parent=11 // pred_region
          _
        $region16: #{tpu_custom_call.1} parent=11 // pred_fallthru
          _
        // Predicated region
        $region17: #{tpu_custom_call.1} parent=11 // pred_check
          %p145 = pneg %p99
        $region18: #{tpu_custom_call.1} parent=11 // pred_check_branch
          %147 = sbr.rel (%p145) target = $region20
        $region19: #{tpu_custom_call.1} parent=11 // pred_region
          _
        $region20: #{tpu_custom_call.1} parent=11 // pred_fallthru
          _
      $region12: #{tpu_custom_call.1} parent=5 // pred_fallthru
        _
      %p148 = scmp.lt.s32.totalorder %s17, 2
      // Predicated region
      $region21: #{tpu_custom_call.1} parent=5 // pred_check
        %p149 = pneg %p148
      $region22: #{tpu_custom_call.1} parent=5 // pred_check_branch
        %151 = sbr.rel (%p149) target = $region24
      $region23: #{tpu_custom_call.1} parent=5 // pred_region
        // Predicated region
        $region25: #{tpu_custom_call.1} parent=23 // pred_check
          %p152 = pneg %p51
        $region26: #{tpu_custom_call.1} parent=23 // pred_check_branch
          %154 = sbr.rel (%p152) target = $region28
        $region27: #{tpu_custom_call.1} parent=23 // pred_region
          %s155 = sand.u32 %s41, 1
          %s156 = scalar_lea.sflag [#allocation4], %s155
          %s157 = sand.u32 %s41, 1
          %s158 = smul.addr %s157, 8
          %s159 = scalar_lea.vmem [#allocation3], %s158
          %s160 = smul.u32 2, %s25
          %162 = vsyncadd %s156, 0
          %s163 = smul.addr %s24, 2
          %s164 = sadd.s32 %s160, %s163
          %s165 = smul.addr %s164, 4
          %s166 = scalar_lea.hbm %s0, %s165
          %s168 = sshll.u32 %s166, 4
          %s169 = int_to_ptr.hbm [resolvable:$true] %s168
          %s170 = sshll.u32 %s159, 4
          %s171 = int_to_ptr.vmem [resolvable:$true] %s170
          %173 = dma.hbm_to_vmem [thread:$0]  %s169, 128, %s171, %s156
        $region28: #{tpu_custom_call.1} parent=23 // pred_fallthru
          _
      $region24: #{tpu_custom_call.1} parent=5 // pred_fallthru
        _
      %p174 = scmp.le.s32.totalorder 1, %s17
      %p175 = scmp.lt.s32.totalorder %s17, 3
      %p176 = pnand %p174, %p175
      %p177 = pneg %p176
      // Predicated region
      $region29: #{tpu_custom_call.1} parent=5 // pred_check
        _
      $region30: #{tpu_custom_call.1} parent=5 // pred_check_branch
        %179 = sbr.rel (%p176) target = $region32
      $region31: #{tpu_custom_call.1} parent=5 // pred_region
        %s180 = ssub.s32 %s17, 1
        %s181 = sand.u32 %s44, 1
        %s182 = scalar_lea.sflag [#allocation4], %s181
        %s183 = sand.u32 %s44, 1
        %s184 = smul.addr %s183, 8
        %s185 = scalar_lea.vmem [#allocation3], %s184
        // Predicated region
        $region33: #{tpu_custom_call.1} parent=31 // pred_check
          %p186 = pneg %p57
        $region34: #{tpu_custom_call.1} parent=31 // pred_check_branch
          %188 = sbr.rel (%p186) target = $region36
        $region35: #{tpu_custom_call.1} parent=31 // pred_region
          %190 = dma.done %s182, 128
        $region36: #{tpu_custom_call.1} parent=31 // pred_fallthru
          _
        %s191 = sand.u32 %s44, 1
        %s192 = scalar_lea.sflag [#allocation4], %s191
        %s193 = sand.u32 %s44, 1
        %s194 = smul.addr %s193, 8
        %s195 = scalar_lea.vmem [#allocation3], %s194
        %p196 = pneg %p57
        %p197 = pneg %p54
        %p198 = pneg %p78
        %p199 = pneg %p75
        %p200 = pneg %p99
        %p201 = pneg %p96
        %p202 = pneg %p127
        %p203 = pneg %p124
        %s204 = sand.u32 %s114, 1
        %s205 = scalar_lea.sflag [#allocation5], %s204
        %s206 = sand.u32 %s114, 1
        %s207 = smul.addr %s206, 2
        %s208 = scalar_lea.vmem [#allocation6], %s207
        %s209 = smul.u32 2, %s27
        %s210 = smul.u32 2, %s27
        %v211 = vld [vmem:[%s185] sm:$0xff]
        %v212 = vld [vmem:[%s1] sm:$0xf]
        %v213 = vld [vmem:[#allocation2] sm:$0x1]
        %215 = vset.pattern.permute.xlu0 0
        %216 = vperm.xlu0 %215, %v212
        %v217 = vpop.permute.xlu0 %216
        %220 = vst [vmem:[#allocation1] ss:$2 sm:$0xff] %v211
        %v221 = vld.sshfl [vmem:[#allocation1] sm:$0xff pattern:$0x75316420]
        %v222 = vld.sshfl [vmem:[#allocation1 + $0x8] sm:$0xff pattern:$0x75316420]
        %v225 = vmul.f32 %v217, %v221
        %v226 = vmul.f32 %v217, %v222
        %vm227 = vcmask 1043456
        %v228 = vsel %vm227, %v225, 0.0
        %v229 = vrot.slane %v228, 4
        %v230 = vadd.f32 %v228, %v229
        %v231 = vrot.slane %v230, 2
        %v232 = vadd.f32 %v230, %v231
        %v233 = vrot.slane %v232, 1
        %v234 = vadd.f32 %v232, %v233
        %v235 = vsel %vm227, %v226, 0.0
        %v236 = vrot.slane %v235, 4
        %v237 = vadd.f32 %v235, %v236
        %v238 = vrot.slane %v237, 2
        %v239 = vadd.f32 %v237, %v238
        %v240 = vrot.slane %v239, 1
        %v241 = vadd.f32 %v239, %v240
        %243 = vset.pattern.permute.xlu0 0
        %244 = vperm.xlu0 %243, %v213
        %v245 = vpop.permute.xlu0 %244
        %v247 = vperm.slane %v245, 0
        %v248 = vadd.f32 %v234, %v247
        %v249 = vadd.f32 %v241, %v247
        %v252 = vrot.slane %v249, 7
        %vm253 = vcmask 1040384
        %v254 = vsel %vm253, %v248, %v252
        %v256 = vlaneseq
        %vm257 = vcmp.ge.s32.totalorder %v256, 0
        %vm258 = vcmp.lt.s32.totalorder %v256, 256
        %vm259 = vmand %vm257, %vm258
        %260 = vst.msk [vmem:[%s208] sm:$0x3] %vm259, %v254
        %s261 = sand.u32 %s114, 1
        %s262 = scalar_lea.sflag [#allocation5], %s261
        %s263 = sand.u32 %s114, 1
        %s264 = smul.addr %s263, 2
        %s265 = scalar_lea.vmem [#allocation6], %s264
        // Predicated region
        $region37: #{tpu_custom_call.1} parent=31 // pred_check
          %p266 = pneg %p124
        $region38: #{tpu_custom_call.1} parent=31 // pred_check_branch
          %268 = sbr.rel (%p266) target = $region40
        $region39: #{tpu_custom_call.1} parent=31 // pred_region
          %s269 = smul.u32 2, %s27
          %271 = vsyncadd %s262, 0
          %s272 = smul.addr %s26, 2
          %s273 = sadd.s32 %s269, %s272
          %s274 = scalar_lea.hbm %s3, %s273
          %s276 = sshll.u32 %s265, 4
          %s277 = int_to_ptr.vmem [resolvable:$true] %s276
          %s278 = sshll.u32 %s274, 4
          %s279 = int_to_ptr.hbm [resolvable:$true] %s278
          %281 = dma.vmem_to_hbm [thread:$0]  %s277, 32, %s279, %s262
        $region40: #{tpu_custom_call.1} parent=31 // pred_fallthru
          _
      $region32: #{tpu_custom_call.1} parent=5 // pred_fallthru
        _
      %p282 = scmp.le.s32.totalorder 2, %s17
      // Predicated region
      $region41: #{tpu_custom_call.1} parent=5 // pred_check
        %p283 = pneg %p282
      $region42: #{tpu_custom_call.1} parent=5 // pred_check_branch
        %285 = sbr.rel (%p283) target = $region44
      $region43: #{tpu_custom_call.1} parent=5 // pred_region
        %s286 = ssub.s32 %s17, 2
        // Predicated region
        $region45: #{tpu_custom_call.1} parent=43 // pred_check
          %p287 = pneg %p130
        $region46: #{tpu_custom_call.1} parent=43 // pred_check_branch
          %289 = sbr.rel (%p287) target = $region48
        $region47: #{tpu_custom_call.1} parent=43 // pred_region
          %s290 = sand.u32 %s115, 1
          %s291 = scalar_lea.sflag [#allocation5], %s290
          %s292 = sand.u32 %s115, 1
          %s293 = smul.addr %s292, 2
          %s294 = scalar_lea.vmem [#allocation6], %s293
          %296 = dma.done %s291, 32
        $region48: #{tpu_custom_call.1} parent=43 // pred_fallthru
          _
      $region44: #{tpu_custom_call.1} parent=5 // pred_fallthru
        _
    $region6: #{tpu_custom_call.1} parent=1 // loop_footer
      %s21 = sadd.s32 1, %s17
    $region7: #{tpu_custom_call.1} parent=1 // loop_footer_branch
      %16 = sbr.rel target = $region3
    $region8: #{tpu_custom_call.1} parent=1 // loop_exit
      _
    %297 = vsyncpa [#allocation4], 1
    %s298 = scalar_lea.sflag [#allocation4], 1
    %299 = vsyncpa %s298, 1
    %300 = vsyncpa [#allocation5], 1
    %s301 = scalar_lea.sflag [#allocation5], 1
    %302 = vsyncpa %s301, 1

</llo_original>
